<compile_context>
chip_gen: v6e
topology: v6e:2x2x1
jax: 0.10.0
libtpu: 0.0.40
codegen_flags: <defaults>
</compile_context>

<pallas_src>
import math

import jax
import jax.numpy as jnp
from jax.experimental import pallas as pl
from jax.experimental.pallas import tpu as pltpu


def _normalizer_kernel(x_ref, scale_ref, bias_ref, o_ref):
    # x_ref / o_ref: (TR, TC) tile of the flattened, lane-folded input/output.
    # scale_ref / bias_ref: (1, TC) f32 slice of the folded per-channel params.
    x = x_ref[...].astype(jnp.float32)
    o_ref[...] = (x * scale_ref[...] + bias_ref[...]).astype(o_ref.dtype)


def _round_up(a, b):
    return ((a + b - 1) // b) * b


def _tpu_device_info():
    """Best-effort (tensorcores_per_chip, physical_vmem_bytes); safe fallbacks."""
    num_cores = 1
    vmem_bytes = 64 << 20  # conservative default: v7x per-TC physical VMEM
    try:
        get_info = getattr(pltpu, "get_tpu_info", None)
        if get_info is not None:
            info = get_info()
            v = getattr(info, "vmem_capacity_bytes", None)
            if isinstance(v, int) and v > 0:
                vmem_bytes = v
            for name in ("num_tensorcores", "tensorcores_per_chip",
                         "num_cores", "cores_per_chip", "core_count"):
                c = getattr(info, name, None)
                if isinstance(c, int) and 0 < c <= 8:
                    num_cores = c
                    break
    except Exception:
        pass
    try:
        kind = jax.devices()[0].device_kind.lower()
        if "v7" in kind:
            num_cores = max(num_cores, 2)
    except Exception:
        pass
    return num_cores, vmem_bytes


def normalizer(x, means, inv_stddevs, *,
               tile_budget_bytes=4 << 20,   # ~4 MiB tiles: top of roofline tier
               min_tile_bytes=1 << 20,      # never shrink below ~1 MiB for steps
               max_folded_lanes=16384):
    """(x - means) * inv_stddevs with means/inv_stddevs broadcast on last dim."""
    assert means.ndim == 1 and means.shape == inv_stddevs.shape
    C = means.shape[0]
    assert x.shape[-1] == C, "last dim of x must match parameter length"

    orig_shape = x.shape
    out_dtype = x.dtype
    itemsize = jnp.dtype(out_dtype).itemsize
    total = x.size
    R = total // C  # logical rows of length C

    # ---- Lane folding: make the lane dim a multiple of 128, but ONLY when the
    # fold is a pure (free) reshape — i.e. R splits evenly into groups of k.
    # Otherwise k = 1: masked partial stores are cheaper than an extra HBM
    # pad/slice pass outside the kernel.
    k = 1
    if C % 128 != 0:
        k0 = 128 // math.gcd(C, 128)
        if R % k0 == 0 and k0 * C <= max_folded_lanes:
            k = k0
    Cf = k * C
    Rf = R // k

    # NOTE: relies on x being logically row-major with channels last; JAX
    # reshape semantics guarantee this fold is a C-order re-view (no copy).
    x2d = x.reshape(Rf, Cf)

    # ---- Per-channel params folded to Cf lanes, kept in f32 ----------------
    inv_f32 = inv_stddevs.astype(jnp.float32)
    scale = jnp.tile(inv_f32, k).reshape(1, Cf)
    bias = jnp.tile(-means.astype(jnp.float32) * inv_f32, k).reshape(1, Cf)

    # ---- Generation-aware tiling --------------------------------------------
    num_cores, vmem_phys = _tpu_device_info()
    sub = max(8, 32 // itemsize)  # sublane packing: 8/16/32 rows per group

    # Lane tiling only when even the minimal sub-row full-width tile exceeds
    # the budget (huge C); requires a 128-aligned folded width.
    tc = Cf
    if Cf * itemsize * sub > tile_budget_bytes and Cf % 128 == 0:
        tc = max(128, ((tile_budget_bytes // (sub * itemsize)) // 128) * 128)
        tc = min(tc, Cf)

    tile_row_bytes = tc * itemsize
    tr_cap = max(sub, ((tile_budget_bytes // tile_row_bytes) // sub) * sub)
    min_rows = max(sub, _round_up(pl.cdiv(min_tile_bytes, tile_row_bytes), sub))

    # Budget-driven row tile (whole extent if it fits in one tile).
    if Rf <= sub or Rf * tile_row_bytes <= tile_budget_bytes:
        tr = Rf                       # full-extent block (always legal)
    else:
        tr = tr_cap                   # multiple of `sub`, < Rf

    # Give every TensorCore >= 2 grid steps (intra-core pipelining; megacore
    # balance on v7x) — but never drop tiles below ~min_tile_bytes to do it.
    lane_steps = pl.cdiv(Cf, tc)
    target_steps = 2 * max(1, num_cores)
    want_row_steps = pl.cdiv(target_steps, lane_steps)
    if Rf > sub and want_row_steps > 1:
        tr_split = max(_round_up(pl.cdiv(Rf, want_row_steps), sub), min_rows)
        if tr_split < tr:
            tr = tr_split

    grid = (pl.cdiv(Rf, tr), lane_steps)

    # Scoped-VMEM limit: double-buffered in+out tiles + params + slack,
    # clamped to a safe fraction of physical VMEM.
    tile_bytes = tr * tc * itemsize
    vmem_limit = 4 * tile_bytes + 4 * tc * 4 + (2 << 20)
    vmem_limit = int(min(max(vmem_limit, 16 << 20), max(16 << 20, vmem_phys // 2)))

    out2d = pl.pallas_call(
        _normalizer_kernel,
        out_shape=jax.ShapeDtypeStruct((Rf, Cf), out_dtype),
        grid=grid,
        in_specs=[
            pl.BlockSpec((tr, tc), lambda i, j: (i, j)),   # x tile
            pl.BlockSpec((1, tc), lambda i, j: (0, j)),    # scale (resident)
            pl.BlockSpec((1, tc), lambda i, j: (0, j)),    # bias  (resident)
        ],
        out_specs=pl.BlockSpec((tr, tc), lambda i, j: (i, j)),
        compiler_params=pltpu.CompilerParams(
            dimension_semantics=("parallel", "parallel"),
            vmem_limit_bytes=vmem_limit,
        ),
    )(x2d, scale, bias)

    return out2d.reshape(orig_shape)


if __name__ == "__main__":
    key = jax.random.PRNGKey(0)
    k_x, k_m, k_s, k_x2 = jax.random.split(key, 4)

    # --- primary check: x (batch=2, seq=8, hidden=32), f32 -------------------
    B, S, C = 2, 8, 32
    x = jax.random.normal(k_x, (B, S, C), dtype=jnp.float32)
    means = jax.random.normal(k_m, (C,), dtype=jnp.float32)
    stddevs = jax.random.uniform(k_s, (C,), dtype=jnp.float32, minval=0.5, maxval=2.0)
    inv_stddevs = 1.0 / stddevs  # module stores 1/stddevs at construction

    out = jax.block_until_ready(normalizer(x, means, inv_stddevs))
    ref = (x - means) * inv_stddevs
    assert out.shape == x.shape and out.dtype == x.dtype
    assert jnp.allclose(out, ref, atol=1e-5, rtol=1e-5)

    # --- ragged rows + non-power-of-two channels (exercises the no-fold,
    #     masked-store path: 21 rows % k0=8 != 0, C=48 lanes) -----------------
    C2 = 48
    x2 = jax.random.normal(k_x2, (3, 7, C2), dtype=jnp.float32)
    means2 = jax.random.normal(k_m, (C2,), dtype=jnp.float32)
    stddevs2 = jax.random.uniform(k_s, (C2,), dtype=jnp.float32, minval=0.5, maxval=2.0)
    inv2 = 1.0 / stddevs2
    out2 = jax.block_until_ready(normalizer(x2, means2, inv2))
    ref2 = (x2 - means2) * inv2
    assert jnp.allclose(out2, ref2, atol=1e-5, rtol=1e-5)

    # --- bf16 input, params kept in f32 inside the kernel --------------------
    xb = x.astype(jnp.bfloat16)
    outb = jax.block_until_ready(normalizer(xb, means, inv_stddevs))
    refb = ((xb.astype(jnp.float32) - means) * inv_stddevs).astype(jnp.bfloat16)
    assert outb.dtype == jnp.bfloat16
    assert jnp.allclose(outb.astype(jnp.float32), refb.astype(jnp.float32),
                        atol=2e-2, rtol=2e-2)

    print("KERNEL_OK")
</pallas_src>

<mosaic_0001>
module attributes {stable_mosaic.version = 11 : i64} {
  func.func @_normalizer_kernel(%arg0: i32, %arg1: i32, %arg2: memref<4x128xf32, #tpu.memory_space<vmem>>, %arg3: memref<1x128xf32, #tpu.memory_space<vmem>>, %arg4: memref<1x128xf32, #tpu.memory_space<vmem>>, %arg5: memref<4x128xf32, #tpu.memory_space<vmem>>) attributes {dimension_semantics = [#tpu.dimension_semantics<parallel>, #tpu.dimension_semantics<parallel>], iteration_bounds = array<i64: 1, 1>, scalar_prefetch = 0 : i64, scratch_operands = 0 : i64, tpu.core_type = #tpu.core_type<tc>, window_params = [{transform_indices = @transform_0, window_bounds = array<i64: 4, 128>}, {transform_indices = @transform_1, window_bounds = array<i64: 1, 128>}, {transform_indices = @transform_2, window_bounds = array<i64: 1, 128>}, {transform_indices = @transform_3, window_bounds = array<i64: 4, 128>}]} {
    %c0 = arith.constant 0 : index
    %c0_0 = arith.constant 0 : index
    %0 = vector.load %arg2[%c0, %c0_0] : memref<4x128xf32, #tpu.memory_space<vmem>>, vector<4x128xf32>
    %c0_1 = arith.constant 0 : index
    %c0_2 = arith.constant 0 : index
    %1 = vector.load %arg3[%c0_1, %c0_2] : memref<1x128xf32, #tpu.memory_space<vmem>>, vector<1x128xf32>
    %2 = vector.broadcast %1 : vector<1x128xf32> to vector<4x128xf32>
    %3 = arith.mulf %0, %2 : vector<4x128xf32>
    %c0_3 = arith.constant 0 : index
    %c0_4 = arith.constant 0 : index
    %4 = vector.load %arg4[%c0_3, %c0_4] : memref<1x128xf32, #tpu.memory_space<vmem>>, vector<1x128xf32>
    %5 = vector.broadcast %4 : vector<1x128xf32> to vector<4x128xf32>
    %6 = arith.addf %3, %5 : vector<4x128xf32>
    %c0_5 = arith.constant 0 : index
    %c0_6 = arith.constant 0 : index
    %7 = vector.load %arg5[%c0_5, %c0_6] : memref<4x128xf32, #tpu.memory_space<vmem>>, vector<4x128xf32>
    tpu.vector_store %arg5[%c0_5, %c0_6], %6 {strides = array<i32>} : memref<4x128xf32, #tpu.memory_space<vmem>>, vector<4x128xf32>,
    return
  }
  func.func @transform_0(%arg0: i32, %arg1: i32) -> (i32, i32) {
    %c0_i32 = arith.constant 0 : i32
    return %arg0, %arg1 : i32, i32
  }
  func.func @transform_1(%arg0: i32, %arg1: i32) -> (i32, i32) {
    %c0_i32 = arith.constant 0 : i32
    %c0_i32_0 = arith.constant 0 : i32
    return %c0_i32, %arg1 : i32, i32
  }
  func.func @transform_2(%arg0: i32, %arg1: i32) -> (i32, i32) {
    %c0_i32 = arith.constant 0 : i32
    %c0_i32_0 = arith.constant 0 : i32
    return %c0_i32, %arg1 : i32, i32
  }
  func.func @transform_3(%arg0: i32, %arg1: i32) -> (i32, i32) {
    %c0_i32 = arith.constant 0 : i32
    return %arg0, %arg1 : i32, i32
  }
}

</mosaic_0001>

<llo_original>
// kernel: tpu_custom_call.1
$region0: #{tpu_custom_call.1}
  #allocation0 [shape = 'u32[]', space=smem, size = 0x4, offset = 0x4, fixed_abs, tag = 'smem constant byte address 0x4 - core index']
  #allocation1 [shape = 'u32[144,128]{1,0:T(1,128)}', space=vmem, size = 0x12000, scoped, tag = 'internal scratch']
  %s0 = inlined_call_operand.hbm [shape: f32[4,128], index: 0, kind: input, shape index: {}]
  %s1 = inlined_call_operand.vmem [shape: f32[1,128], index: 1, kind: input, shape index: {}]
  %s2 = inlined_call_operand.vmem [shape: f32[1,128], index: 2, kind: input, shape index: {}]
  %s3 = inlined_call_operand.hbm [shape: f32[4,128], index: 3, kind: output, shape index: {}]
  %s4 = sld [smem:[#allocation0]]
  $region26: #{tpu_custom_call.1} parent=0
    _
  %s6 = ssub.s32 1, %s4
  %s7 = scalar_select 0, %s6, %s4
  $region1: #{tpu_custom_call.1} parent=0
    #allocation2 [shape = 'u8[2048]{0}', space=vmem, size = 0x800, scoped, tag = 'input window, operand 0, single buffered']
    #allocation3 [shape = 's32[1]{0}', space=sflag, size = 0x4, scoped, tag = 'scoped memory for tpu_custom_call.1']
    #allocation4 [shape = 's32[1]{0}', space=sflag, size = 0x4, scoped, tag = 'scoped memory for tpu_custom_call.1']
    #allocation5 [shape = 'u8[2048]{0}', space=vmem, size = 0x800, scoped, tag = 'output window, operand 0, single buffered']
    %8 = vsyncpa [#allocation3], 0
    %9 = vsyncpa [#allocation4], 0
    // Predicated region
    $region2: #{tpu_custom_call.1} parent=1 // pred_check
      _
    $region3: #{tpu_custom_call.1} parent=1 // pred_check_branch
      %11 = sbr.rel (0) target = $region5
    $region4: #{tpu_custom_call.1} parent=1 // pred_region
      %s13 = ssub.s32 64, 64
      %14 = vsyncadd [#allocation3], %s13
      %s16 = sshll.u32 [#allocation2], 4
      %s17 = int_to_ptr.vmem [resolvable:$true] %s16
      %19 = dma.hbm_to_vmem [thread:$0]  %s0, 64, %s17, [#allocation3]
    $region5: #{tpu_custom_call.1} parent=1 // pred_fallthru
      _
    // Predicated region
    $region6: #{tpu_custom_call.1} parent=1 // pred_check
      _
    $region7: #{tpu_custom_call.1} parent=1 // pred_check_branch
      %21 = sbr.rel (0) target = $region9
    $region8: #{tpu_custom_call.1} parent=1 // pred_region
      _
    $region9: #{tpu_custom_call.1} parent=1 // pred_fallthru
      _
    // Predicated region
    $region10: #{tpu_custom_call.1} parent=1 // pred_check
      _
    $region11: #{tpu_custom_call.1} parent=1 // pred_check_branch
      %23 = sbr.rel (0) target = $region13
    $region12: #{tpu_custom_call.1} parent=1 // pred_region
      _
    $region13: #{tpu_custom_call.1} parent=1 // pred_fallthru
      _
    // Predicated region
    $region14: #{tpu_custom_call.1} parent=1 // pred_check
      _
    $region15: #{tpu_custom_call.1} parent=1 // pred_check_branch
      %25 = sbr.rel (0) target = $region17
    $region16: #{tpu_custom_call.1} parent=1 // pred_region
      %26 = dma.done [#allocation3], 64
    $region17: #{tpu_custom_call.1} parent=1 // pred_fallthru
      _
    %v27 = vld [vmem:[#allocation2] sm:$0xf]
    %v28 = vld [vmem:[%s1] sm:$0x1]
    %v30 = vlaneseq
    %v31 = vshrl.u32 %v30, 7
    %v32 = vsub.s32 0, %v31
    %v33 = vrot.slane %v28, %v32
    %v35 = vmul.f32 %v27, %v33
    %v36 = vld [vmem:[%s2] sm:$0x1]
    %v38 = vlaneseq
    %v39 = vshrl.u32 %v38, 7
    %v40 = vsub.s32 0, %v39
    %v41 = vrot.slane %v36, %v40
    %v43 = vadd.f32 %v35, %v41
    %44 = vst [vmem:[#allocation5] sm:$0xf] %v43
    // Predicated region
    $region18: #{tpu_custom_call.1} parent=1 // pred_check
      _
    $region19: #{tpu_custom_call.1} parent=1 // pred_check_branch
      %46 = sbr.rel (0) target = $region21
    $region20: #{tpu_custom_call.1} parent=1 // pred_region
      %s48 = ssub.s32 64, 64
      %49 = vsyncadd [#allocation4], %s48
      %s51 = sshll.u32 [#allocation5], 4
      %s52 = int_to_ptr.vmem [resolvable:$true] %s51
      %54 = dma.vmem_to_hbm [thread:$0]  %s52, 64, %s3, [#allocation4]
    $region21: #{tpu_custom_call.1} parent=1 // pred_fallthru
      _
    // Predicated region
    $region22: #{tpu_custom_call.1} parent=1 // pred_check
      _
    $region23: #{tpu_custom_call.1} parent=1 // pred_check_branch
      %56 = sbr.rel (0) target = $region25
    $region24: #{tpu_custom_call.1} parent=1 // pred_region
      %57 = dma.done [#allocation4], 64
    $region25: #{tpu_custom_call.1} parent=1 // pred_fallthru
      _
    %58 = vsyncpa [#allocation3], 1
    %59 = vsyncpa [#allocation4], 1

</llo_original>
